<compile_context>
chip_gen: v5e
topology: v5e:2x2
jax: 0.10.0
libtpu: 0.0.40
codegen_flags: <defaults>
</compile_context>

<pallas_src>
import functools

import jax
import jax.numpy as jnp
import numpy as np
from jax.experimental import pallas as pl
from jax.experimental.pallas import tpu as pltpu


def _round_up(x, m):
    return (x + m - 1) // m * m


def _erf_f32(x):
    # Abramowitz & Stegun 7.1.26 rational approximation, |err| <= 1.5e-7
    # (float32-level accuracy).  Uses only mul/add (VPU) + exp/recip (EUP).
    # TODO(synk): replace with lax.erf once Mosaic lowering supports erf_p.
    a1, a2, a3, a4, a5 = (0.254829592, -0.284496736, 1.421413741,
                          -1.453152027, 1.061405429)
    p = 0.3275911
    z = jnp.abs(x)
    # EUP reciprocal keeps the divide off the VALU slot.
    t = pl.reciprocal(1.0 + p * z, approx=True)
    poly = ((((a5 * t + a4) * t + a3) * t + a2) * t + a1) * t
    y = 1.0 - poly * jnp.exp(-z * z)
    return jnp.where(x < 0.0, -y, y)


def _gelu_erf(x):
    return x * 0.5 * (1.0 + _erf_f32(x * np.float32(1.0 / np.sqrt(2.0))))


# -----------------------------------------------------------------------------
# Stage 1: dense -> gelu -> LayerNorm, per token tile.
#   refs: x(TN,H) f32, w_dense(H,H) f32, b_dense(1,H), ln_w(1,H), ln_b(1,H)
#         -> h(TN,H) bf16
# -----------------------------------------------------------------------------
def _transform_kernel(x_ref, w1_ref, b1_ref, g_ref, beta_ref, h_ref, *, eps):
    h = jnp.dot(x_ref[...], w1_ref[...],
                preferred_element_type=jnp.float32) + b1_ref[...]
    h = _gelu_erf(h)
    u = jnp.mean(h, axis=-1, keepdims=True)
    s = jnp.mean(jnp.square(h - u), axis=-1, keepdims=True)
    h = (h - u) * jax.lax.rsqrt(s + eps)
    h_ref[...] = (g_ref[...] * h + beta_ref[...]).astype(h_ref.dtype)


# -----------------------------------------------------------------------------
# Stage 2: decoder matmul + bias.
#   refs: h(TN,H) bf16, w_dec(TV,H) bf16 (native (V,H) layout), bias(1,TV) f32
#         -> out(TN,TV)
# -----------------------------------------------------------------------------
def _decoder_kernel(h_ref, wdec_ref, bias_ref, out_ref):
    # Contract on H against the (TV, H) embedding block (i.e. h @ W^T) so the
    # embedding is never transposed in HBM.  f32 accumulation on the MXU.
    acc = jax.lax.dot_general(
        h_ref[...], wdec_ref[...],
        dimension_numbers=(((1,), (1,)), ((), ())),
        preferred_element_type=jnp.float32)
    out_ref[...] = (acc + bias_ref[...]).astype(out_ref.dtype)


# -----------------------------------------------------------------------------
# Wrapper: tiling, layout, the two pallas_calls.
# -----------------------------------------------------------------------------
def bert_lm_prediction_head(hidden_states, params, *, eps=1e-12,
                            tn=256, tv=1024,
                            decoder_dtype=jnp.bfloat16,
                            logits_dtype=jnp.float32):
    """hidden_states: (..., H).
    params = (w_dense(H,H) [x@W layout], b_dense(H,), ln_w(H,), ln_b(H,),
              emb_w(V,H) [tied embedding], dec_bias(V,))."""
    w_dense, b_dense, ln_w, ln_b, emb_w, dec_bias = params
    H = w_dense.shape[0]
    V = emb_w.shape[0]

    lead = hidden_states.shape[:-1]
    x = hidden_states.reshape(-1, H).astype(jnp.float32)
    N = x.shape[0]

    # Token tile: multiple of 16 sublanes (bf16 packing); vocab tile: x128 lanes.
    TN = min(_round_up(tn, 16), _round_up(N, 16))
    TV = min(_round_up(tv, 128), _round_up(V, 128))
    n_tok = pl.cdiv(N, TN)
    n_voc = pl.cdiv(V, TV)

    w1 = w_dense.astype(jnp.float32)
    b1 = b_dense.astype(jnp.float32).reshape(1, H)
    g = ln_w.astype(jnp.float32).reshape(1, H)
    beta = ln_b.astype(jnp.float32).reshape(1, H)
    # Decoder weight kept in its native (V, H) layout (no HBM transpose / pad)
    # and streamed in bf16.  In a real model store the embedding in bf16 so
    # this cast disappears entirely.
    w_dec = emb_w.astype(decoder_dtype)
    bias = dec_bias.astype(jnp.float32).reshape(1, V)

    # ---- Stage 1: transform (dense + gelu + LayerNorm) ----------------------
    # TODO(synk): pl.Buffered(1) on the constant-index operands (w_dense, the
    # (1,H) vectors) would halve their VMEM; skipped to keep lowering maximally
    # portable — the config already fits v5e's 16 MiB default scoped VMEM.
    h = pl.pallas_call(
        functools.partial(_transform_kernel, eps=eps),
        out_shape=jax.ShapeDtypeStruct((N, H), decoder_dtype),
        grid_spec=pltpu.PrefetchScalarGridSpec(
            num_scalar_prefetch=0,
            grid=(n_tok,),
            in_specs=[
                pl.BlockSpec((TN, H), lambda i: (i, 0)),   # x tokens
                pl.BlockSpec((H, H), lambda i: (0, 0)),    # dense weight
                pl.BlockSpec((1, H), lambda i: (0, 0)),    # dense bias
                pl.BlockSpec((1, H), lambda i: (0, 0)),    # LN gamma
                pl.BlockSpec((1, H), lambda i: (0, 0)),    # LN beta
            ],
            out_specs=pl.BlockSpec((TN, H), lambda i: (i, 0)),
        ),
        compiler_params=pltpu.CompilerParams(
            dimension_semantics=("parallel",),
            vmem_limit_bytes=32 * 1024 * 1024),
    )(x, w1, b1, g, beta)

    # ---- Stage 2: decoder matmul + bias -------------------------------------
    # Vocab axis OUTER ("parallel" -> megacore shard on v7x even when N <= TN);
    # token axis inner & sequential so each (TV,H) weight block is DMA'd once.
    logits = pl.pallas_call(
        _decoder_kernel,
        out_shape=jax.ShapeDtypeStruct((N, V), logits_dtype),
        grid_spec=pltpu.PrefetchScalarGridSpec(
            num_scalar_prefetch=0,
            grid=(n_voc, n_tok),
            in_specs=[
                pl.BlockSpec((TN, H), lambda j, i: (i, 0)),   # transformed h
                pl.BlockSpec((TV, H), lambda j, i: (j, 0)),   # embedding block
                pl.BlockSpec((1, TV), lambda j, i: (0, j)),   # decoder bias
            ],
            out_specs=pl.BlockSpec((TN, TV), lambda j, i: (i, j)),
        ),
        compiler_params=pltpu.CompilerParams(
            dimension_semantics=("parallel", "arbitrary"),
            vmem_limit_bytes=32 * 1024 * 1024),
    )(h, w_dec, bias)

    return logits.reshape(*lead, V)


# -----------------------------------------------------------------------------
# Pure-JAX reference (mirrors the PyTorch forward exactly, full f32).
# -----------------------------------------------------------------------------
def bert_lm_prediction_head_ref(hidden_states, params, eps=1e-12):
    w_dense, b_dense, ln_w, ln_b, emb_w, dec_bias = params
    hp = jax.lax.Precision.HIGHEST
    h = jnp.dot(hidden_states, w_dense, precision=hp) + b_dense
    h = h * 0.5 * (1.0 + jax.scipy.special.erf(h / jnp.sqrt(2.0)))
    u = jnp.mean(h, axis=-1, keepdims=True)
    s = jnp.mean((h - u) ** 2, axis=-1, keepdims=True)
    h = (h - u) / jnp.sqrt(s + eps)
    h = ln_w * h + ln_b
    return jnp.dot(h, emb_w.T, precision=hp) + dec_bias


# -----------------------------------------------------------------------------
if __name__ == "__main__":
    B, S, H, V = 2, 8, 128, 1024   # batch, seq, hidden, vocab

    key = jax.random.PRNGKey(0)
    k = jax.random.split(key, 7)
    hidden_states = jax.random.normal(k[0], (B, S, H), jnp.float32)
    # BERT-style init scales (weights ~ N(0, 0.02)).
    w_dense = 0.02 * jax.random.normal(k[1], (H, H), jnp.float32)
    b_dense = 0.02 * jax.random.normal(k[2], (H,), jnp.float32)
    ln_w = 1.0 + 0.05 * jax.random.normal(k[3], (H,), jnp.float32)
    ln_b = 0.05 * jax.random.normal(k[4], (H,), jnp.float32)
    emb_w = 0.02 * jax.random.normal(k[5], (V, H), jnp.float32)   # tied embedding
    dec_bias = 0.02 * jax.random.normal(k[6], (V,), jnp.float32)
    params = (w_dense, b_dense, ln_w, ln_b, emb_w, dec_bias)

    out = bert_lm_prediction_head(hidden_states, params)
    out = jax.block_until_ready(out)

    ref = bert_lm_prediction_head_ref(hidden_states, params)
    assert out.shape == (B, S, V)
    # Decoder operands are streamed in bf16 (f32 accumulation), so compare at
    # bf16-level tolerance against the full-f32 reference.
    np.testing.assert_allclose(np.asarray(out), np.asarray(ref),
                               rtol=1e-2, atol=1e-2)
    print("KERNEL_OK")
</pallas_src>

<mosaic_0001>
module attributes {stable_mosaic.version = 11 : i64} {
  func.func @_transform_kernel(%arg0: i32, %arg1: memref<16x128xf32, #tpu.memory_space<vmem>>, %arg2: memref<128x128xf32, #tpu.memory_space<vmem>>, %arg3: memref<1x128xf32, #tpu.memory_space<vmem>>, %arg4: memref<1x128xf32, #tpu.memory_space<vmem>>, %arg5: memref<1x128xf32, #tpu.memory_space<vmem>>, %arg6: memref<16x128xbf16, #tpu.memory_space<vmem>>) attributes {dimension_semantics = [#tpu.dimension_semantics<parallel>], iteration_bounds = array<i64: 1>, scalar_prefetch = 0 : i64, scratch_operands = 0 : i64, tpu.core_type = #tpu.core_type<tc>, window_params = [{transform_indices = @transform_0, window_bounds = array<i64: 16, 128>}, {pipeline_mode = #tpu.pipeline_mode<synchronous>, transform_indices = @transform_1, window_bounds = array<i64: 128, 128>}, {pipeline_mode = #tpu.pipeline_mode<synchronous>, transform_indices = @transform_2, window_bounds = array<i64: 1, 128>}, {pipeline_mode = #tpu.pipeline_mode<synchronous>, transform_indices = @transform_3, window_bounds = array<i64: 1, 128>}, {pipeline_mode = #tpu.pipeline_mode<synchronous>, transform_indices = @transform_4, window_bounds = array<i64: 1, 128>}, {transform_indices = @transform_5, window_bounds = array<i64: 16, 128>}]} {
    %c0 = arith.constant 0 : index
    %c0_0 = arith.constant 0 : index
    %0 = vector.load %arg1[%c0, %c0_0] : memref<16x128xf32, #tpu.memory_space<vmem>>, vector<16x128xf32>
    %c0_1 = arith.constant 0 : index
    %c0_2 = arith.constant 0 : index
    %1 = vector.load %arg2[%c0_1, %c0_2] : memref<128x128xf32, #tpu.memory_space<vmem>>, vector<128x128xf32>
    %cst = arith.constant dense<0.000000e+00> : vector<16x128xf32>
    %2 = tpu.matmul %0, %1, %cst {dimension_numbers = #tpu.dot_dimension_numbers<[1], [0], [0], [1], [0, 0, 1, 1], [], []>} : vector<16x128xf32>, vector<128x128xf32>, vector<16x128xf32> -> vector<16x128xf32>
    %c0_3 = arith.constant 0 : index
    %c0_4 = arith.constant 0 : index
    %3 = vector.load %arg3[%c0_3, %c0_4] : memref<1x128xf32, #tpu.memory_space<vmem>>, vector<1x128xf32>
    %4 = vector.broadcast %3 : vector<1x128xf32> to vector<16x128xf32>
    %5 = arith.addf %2, %4 : vector<16x128xf32>
    %cst_5 = arith.constant 5.000000e-01 : f32
    %6 = vector.broadcast %cst_5 : f32 to vector<16x128xf32>
    %7 = arith.mulf %5, %6 : vector<16x128xf32>
    %cst_6 = arith.constant 0.707106769 : f32
    %8 = vector.broadcast %cst_6 : f32 to vector<16x128xf32>
    %9 = arith.mulf %5, %8 : vector<16x128xf32>
    %10 = math.absf %9 : vector<16x128xf32>
    %cst_7 = arith.constant 0.327591091 : f32
    %11 = vector.broadcast %cst_7 : f32 to vector<16x128xf32>
    %12 = arith.mulf %11, %10 : vector<16x128xf32>
    %cst_8 = arith.constant 1.000000e+00 : f32
    %13 = vector.broadcast %cst_8 : f32 to vector<16x128xf32>
    %14 = arith.addf %13, %12 : vector<16x128xf32>
    %15 = tpu.reciprocal %14 {approx = true} : vector<16x128xf32> -> vector<16x128xf32>
    %cst_9 = arith.constant 1.06140542 : f32
    %16 = vector.broadcast %cst_9 : f32 to vector<16x128xf32>
    %17 = arith.mulf %16, %15 : vector<16x128xf32>
    %cst_10 = arith.constant -1.45315206 : f32
    %18 = vector.broadcast %cst_10 : f32 to vector<16x128xf32>
    %19 = arith.addf %17, %18 : vector<16x128xf32>
    %20 = arith.mulf %19, %15 : vector<16x128xf32>
    %cst_11 = arith.constant 1.42141378 : f32
    %21 = vector.broadcast %cst_11 : f32 to vector<16x128xf32>
    %22 = arith.addf %20, %21 : vector<16x128xf32>
    %23 = arith.mulf %22, %15 : vector<16x128xf32>
    %cst_12 = arith.constant -0.284496725 : f32
    %24 = vector.broadcast %cst_12 : f32 to vector<16x128xf32>
    %25 = arith.addf %23, %24 : vector<16x128xf32>
    %26 = arith.mulf %25, %15 : vector<16x128xf32>
    %cst_13 = arith.constant 0.254829586 : f32
    %27 = vector.broadcast %cst_13 : f32 to vector<16x128xf32>
    %28 = arith.addf %26, %27 : vector<16x128xf32>
    %29 = arith.mulf %28, %15 : vector<16x128xf32>
    %cst_14 = arith.constant 0.000000e+00 : f32
    %30 = vector.broadcast %cst_14 : f32 to vector<16x128xf32>
    %31 = arith.subf %30, %10 : vector<16x128xf32>
    %32 = arith.mulf %31, %10 : vector<16x128xf32>
    %33 = math.exp %32 : vector<16x128xf32>
    %34 = arith.mulf %29, %33 : vector<16x128xf32>
    %cst_15 = arith.constant 1.000000e+00 : f32
    %35 = vector.broadcast %cst_15 : f32 to vector<16x128xf32>
    %36 = arith.subf %35, %34 : vector<16x128xf32>
    %cst_16 = arith.constant 0.000000e+00 : f32
    %37 = vector.broadcast %cst_16 : f32 to vector<16x128xf32>
    %38 = arith.cmpf olt, %9, %37 : vector<16x128xf32>
    %cst_17 = arith.constant 0.000000e+00 : f32
    %39 = vector.broadcast %cst_17 : f32 to vector<16x128xf32>
    %40 = arith.subf %39, %36 : vector<16x128xf32>
    %41 = arith.select %38, %40, %36 : vector<16x128xi1>, vector<16x128xf32>
    %cst_18 = arith.constant 1.000000e+00 : f32
    %42 = vector.broadcast %cst_18 : f32 to vector<16x128xf32>
    %43 = arith.addf %42, %41 : vector<16x128xf32>
    %44 = arith.mulf %7, %43 : vector<16x128xf32>
    %cst_19 = arith.constant dense<0.000000e+00> : vector<16xf32>
    %45 = vector.multi_reduction <add>, %44, %cst_19 [1] : vector<16x128xf32> to vector<16xf32>
    %46 = vector.shape_cast %45 : vector<16xf32> to vector<16x1xf32>
    %cst_20 = arith.constant 1.280000e+02 : f32
    %47 = vector.broadcast %cst_20 : f32 to vector<16x1xf32>
    %48 = arith.divf %46, %47 : vector<16x1xf32>
    %49 = vector.broadcast %48 : vector<16x1xf32> to vector<16x128xf32>
    %50 = arith.subf %44, %49 : vector<16x128xf32>
    %51 = arith.mulf %50, %50 : vector<16x128xf32>
    %cst_21 = arith.constant dense<0.000000e+00> : vector<16xf32>
    %52 = vector.multi_reduction <add>, %51, %cst_21 [1] : vector<16x128xf32> to vector<16xf32>
    %53 = vector.shape_cast %52 : vector<16xf32> to vector<16x1xf32>
    %cst_22 = arith.constant 1.280000e+02 : f32
    %54 = vector.broadcast %cst_22 : f32 to vector<16x1xf32>
    %55 = arith.divf %53, %54 : vector<16x1xf32>
    %56 = vector.broadcast %48 : vector<16x1xf32> to vector<16x128xf32>
    %57 = arith.subf %44, %56 : vector<16x128xf32>
    %cst_23 = arith.constant 9.99999996E-13 : f32
    %58 = vector.broadcast %cst_23 : f32 to vector<16x1xf32>
    %59 = arith.addf %55, %58 : vector<16x1xf32>
    %60 = math.rsqrt %59 : vector<16x1xf32>
    %61 = vector.broadcast %60 : vector<16x1xf32> to vector<16x128xf32>
    %62 = arith.mulf %57, %61 : vector<16x128xf32>
    %c0_24 = arith.constant 0 : index
    %c0_25 = arith.constant 0 : index
    %63 = vector.load %arg4[%c0_24, %c0_25] : memref<1x128xf32, #tpu.memory_space<vmem>>, vector<1x128xf32>
    %64 = vector.broadcast %63 : vector<1x128xf32> to vector<16x128xf32>
    %65 = arith.mulf %64, %62 : vector<16x128xf32>
    %c0_26 = arith.constant 0 : index
    %c0_27 = arith.constant 0 : index
    %66 = vector.load %arg5[%c0_26, %c0_27] : memref<1x128xf32, #tpu.memory_space<vmem>>, vector<1x128xf32>
    %67 = vector.broadcast %66 : vector<1x128xf32> to vector<16x128xf32>
    %68 = arith.addf %65, %67 : vector<16x128xf32>
    %69 = arith.truncf %68 : vector<16x128xf32> to vector<16x128xbf16>
    %c0_28 = arith.constant 0 : index
    %c0_29 = arith.constant 0 : index
    %70 = vector.load %arg6[%c0_28, %c0_29] : memref<16x128xbf16, #tpu.memory_space<vmem>>, vector<16x128xbf16>
    tpu.vector_store %arg6[%c0_28, %c0_29], %69 {strides = array<i32>} : memref<16x128xbf16, #tpu.memory_space<vmem>>, vector<16x128xbf16>,
    return
  }
  func.func @transform_0(%arg0: i32) -> (i32, i32) {
    %c0_i32 = arith.constant 0 : i32
    %c0_i32_0 = arith.constant 0 : i32
    return %arg0, %c0_i32 : i32, i32
  }
  func.func @transform_1(%arg0: i32) -> (i32, i32) {
    %c0_i32 = arith.constant 0 : i32
    %c0_i32_0 = arith.constant 0 : i32
    %c0_i32_1 = arith.constant 0 : i32
    return %c0_i32, %c0_i32_0 : i32, i32
  }
  func.func @transform_2(%arg0: i32) -> (i32, i32) {
    %c0_i32 = arith.constant 0 : i32
    %c0_i32_0 = arith.constant 0 : i32
    %c0_i32_1 = arith.constant 0 : i32
    return %c0_i32, %c0_i32_0 : i32, i32
  }
  func.func @transform_3(%arg0: i32) -> (i32, i32) {
    %c0_i32 = arith.constant 0 : i32
    %c0_i32_0 = arith.constant 0 : i32
    %c0_i32_1 = arith.constant 0 : i32
    return %c0_i32, %c0_i32_0 : i32, i32
  }
  func.func @transform_4(%arg0: i32) -> (i32, i32) {
    %c0_i32 = arith.constant 0 : i32
    %c0_i32_0 = arith.constant 0 : i32
    %c0_i32_1 = arith.constant 0 : i32
    return %c0_i32, %c0_i32_0 : i32, i32
  }
  func.func @transform_5(%arg0: i32) -> (i32, i32) {
    %c0_i32 = arith.constant 0 : i32
    %c0_i32_0 = arith.constant 0 : i32
    return %arg0, %c0_i32 : i32, i32
  }
}

</mosaic_0001>

<llo_original>
// kernel: tpu_custom_call.1
$region0: #{tpu_custom_call.1}
  #allocation0 [shape = 'u32[]', space=smem, size = 0x4, offset = 0x4, fixed_abs, tag = 'smem constant byte address 0x4 - core index']
  #allocation1 [shape = 'u32[72,128]{1,0:T(1,128)}', space=vmem, size = 0x9000, scoped, tag = 'internal scratch']
  %s0 = inlined_call_operand.hbm [shape: f32[16,128], index: 0, kind: input, shape index: {}]
  %s1 = inlined_call_operand.hbm [shape: f32[128,128], index: 1, kind: input, shape index: {}]
  %s2 = inlined_call_operand.vmem [shape: f32[1,128], index: 2, kind: input, shape index: {}]
  %s3 = inlined_call_operand.vmem [shape: f32[1,128], index: 3, kind: input, shape index: {}]
  %s4 = inlined_call_operand.vmem [shape: f32[1,128], index: 4, kind: input, shape index: {}]
  %s5 = inlined_call_operand.hbm [shape: bf16[16,128], index: 5, kind: output, shape index: {}]
  %s6 = sld [smem:[#allocation0]]
  $region38: #{tpu_custom_call.1} parent=0
    _
  %s8 = ssub.s32 1, %s6
  %s9 = scalar_select 0, %s8, %s6
  $region1: #{tpu_custom_call.1} parent=0
    #allocation2 [shape = 'u8[8192]{0}', space=vmem, size = 0x2000, scoped, tag = 'input window, operand 0, single buffered']
    #allocation3 [shape = 's32[1]{0}', space=sflag, size = 0x4, scoped, tag = 'scoped memory for tpu_custom_call.1']
    #allocation4 [shape = 's32[1]{0}', space=sflag, size = 0x4, scoped, tag = 'scoped memory for tpu_custom_call.1']
    #allocation5 [shape = 'u8[65536]{0}', space=vmem, size = 0x10000, scoped, tag = 'input window, operand 1, single buffered']
    #allocation6 [shape = 's32[1]{0}', space=sflag, size = 0x4, scoped, tag = 'scoped memory for tpu_custom_call.1']
    #allocation7 [shape = 'u8[4096]{0}', space=vmem, size = 0x1000, scoped, tag = 'output window, operand 0, single buffered']
    %10 = vsyncpa [#allocation3], 0
    %11 = vsyncpa [#allocation6], 0
    %12 = vsyncpa [#allocation4], 0
    // Predicated region
    $region2: #{tpu_custom_call.1} parent=1 // pred_check
      _
    $region3: #{tpu_custom_call.1} parent=1 // pred_check_branch
      %14 = sbr.rel (0) target = $region5
    $region4: #{tpu_custom_call.1} parent=1 // pred_region
      %16 = vsyncadd [#allocation3], 0
      %s17 = sshll.u32 %s0, 4
      %s18 = int_to_ptr.hbm [resolvable:$true] %s17
      %s19 = sshll.u32 [#allocation2], 4
      %s20 = int_to_ptr.vmem [resolvable:$true] %s19
      %25 = dma.hbm_to_vmem [thread:$0]  %s18, 256, %s20, [#allocation3], 128, 128, 8
    $region5: #{tpu_custom_call.1} parent=1 // pred_fallthru
      _
    // Predicated region
    $region6: #{tpu_custom_call.1} parent=1 // pred_check
      _
    $region7: #{tpu_custom_call.1} parent=1 // pred_check_branch
      %27 = sbr.rel (0) target = $region9
    $region8: #{tpu_custom_call.1} parent=1 // pred_region
      %29 = vsyncadd [#allocation6], 0
      %s30 = sshll.u32 %s1, 4
      %s31 = int_to_ptr.hbm [resolvable:$true] %s30
      %s32 = sshll.u32 [#allocation5], 4
      %s33 = int_to_ptr.vmem [resolvable:$true] %s32
      %38 = dma.hbm_to_vmem [thread:$0]  %s31, 2048, %s33, [#allocation6], 128, 128, 8
    $region9: #{tpu_custom_call.1} parent=1 // pred_fallthru
      _
    // Predicated region
    $region10: #{tpu_custom_call.1} parent=1 // pred_check
      _
    $region11: #{tpu_custom_call.1} parent=1 // pred_check_branch
      %40 = sbr.rel (0) target = $region13
    $region12: #{tpu_custom_call.1} parent=1 // pred_region
      _
    $region13: #{tpu_custom_call.1} parent=1 // pred_fallthru
      _
    // Predicated region
    $region14: #{tpu_custom_call.1} parent=1 // pred_check
      _
    $region15: #{tpu_custom_call.1} parent=1 // pred_check_branch
      %42 = sbr.rel (0) target = $region17
    $region16: #{tpu_custom_call.1} parent=1 // pred_region
      _
    $region17: #{tpu_custom_call.1} parent=1 // pred_fallthru
      _
    // Predicated region
    $region18: #{tpu_custom_call.1} parent=1 // pred_check
      _
    $region19: #{tpu_custom_call.1} parent=1 // pred_check_branch
      %44 = sbr.rel (0) target = $region21
    $region20: #{tpu_custom_call.1} parent=1 // pred_region
      _
    $region21: #{tpu_custom_call.1} parent=1 // pred_fallthru
      _
    // Predicated region
    $region22: #{tpu_custom_call.1} parent=1 // pred_check
      _
    $region23: #{tpu_custom_call.1} parent=1 // pred_check_branch
      %46 = sbr.rel (0) target = $region25
    $region24: #{tpu_custom_call.1} parent=1 // pred_region
      %48 = dma.done [#allocation3], 256
    $region25: #{tpu_custom_call.1} parent=1 // pred_fallthru
      _
    // Predicated region
    $region26: #{tpu_custom_call.1} parent=1 // pred_check
      _
    $region27: #{tpu_custom_call.1} parent=1 // pred_check_branch
      %50 = sbr.rel (0) target = $region29
    $region28: #{tpu_custom_call.1} parent=1 // pred_region
      %52 = dma.done [#allocation6], 2048
    $region29: #{tpu_custom_call.1} parent=1 // pred_fallthru
      _
    %v53 = vld [vmem:[#allocation2] sm:$0xff]
    %v54 = vld [vmem:[#allocation2 + $0x8] sm:$0xff]
    %v55 = vld [vmem:[#allocation5] sm:$0xff]
    %v56 = vld [vmem:[#allocation5 + $0x8] sm:$0xff]
    %v57 = vld [vmem:[#allocation5 + $0x10] sm:$0xff]
    %v58 = vld [vmem:[#allocation5 + $0x18] sm:$0xff]
    %v59 = vld [vmem:[#allocation5 + $0x20] sm:$0xff]
    %v60 = vld [vmem:[#allocation5 + $0x28] sm:$0xff]
    %v61 = vld [vmem:[#allocation5 + $0x30] sm:$0xff]
    %v62 = vld [vmem:[#allocation5 + $0x38] sm:$0xff]
    %v63 = vld [vmem:[#allocation5 + $0x40] sm:$0xff]
    %v64 = vld [vmem:[#allocation5 + $0x48] sm:$0xff]
    %v65 = vld [vmem:[#allocation5 + $0x50] sm:$0xff]
    %v66 = vld [vmem:[#allocation5 + $0x58] sm:$0xff]
    %v67 = vld [vmem:[#allocation5 + $0x60] sm:$0xff]
    %v68 = vld [vmem:[#allocation5 + $0x68] sm:$0xff]
    %v69 = vld [vmem:[#allocation5 + $0x70] sm:$0xff]
    %v70 = vld [vmem:[#allocation5 + $0x78] sm:$0xff]
    %v71 = vld [vmem:[%s2] sm:$0x1]
    %v73 = vperm.slane %v71, 0
    %75 = vmatpush.msra.mxu0 %v70
    %76 = vmatpush.msra.mxu0 %v69
    %77 = vmatpush.msra.mxu0 %v68
    %78 = vmatpush.msra.mxu0 %v67
    %79 = vmatpush.msra.mxu0 %v66
    %80 = vmatpush.msra.mxu0 %v65
    %81 = vmatpush.msra.mxu0 %v64
    %82 = vmatpush.msra.mxu0 %v63
    %83 = vmatpush.msra.mxu0 %v62
    %84 = vmatpush.msra.mxu0 %v61
    %85 = vmatpush.msra.mxu0 %v60
    %86 = vmatpush.msra.mxu0 %v59
    %87 = vmatpush.msra.mxu0 %v58
    %88 = vmatpush.msra.mxu0 %v57
    %89 = vmatpush.msra.mxu0 %v56
    %90 = vmatpush.msra.mxu0 %v55
    %91 = vmatmul.f32.gmra.mxu0 %v53
    %v92 = vpop.f32.mrf.mxu0
    %v93 = vadd.f32 %v73, %v92
    %94 = vmatmul.f32.gmra.mxu0 %v54
    %v95 = vpop.f32.mrf.mxu0
    %v96 = vadd.f32 %v73, %v95
    %97 = vdwg.mxu0
    %v98 = vmul.f32 %v93, 0.5
    %v99 = vmul.f32 %v96, 0.5
    %v100 = vmul.f32 %v93, 0.70710677
    %v101 = vmul.f32 %v96, 0.70710677
    %v102 = vand.u32 2147483647, %v100
    %v103 = vand.u32 2147483647, %v101
    %v104 = vmul.f32 %v102, 0.3275911
    %v105 = vmul.f32 %v103, 0.3275911
    %v106 = vadd.f32 %v104, 1.0
    %v107 = vadd.f32 %v105, 1.0
    %v108 = vrcp.pop %v106
    %v109 = vrcp.pop %v107
    %v110 = vmul.f32 %v108, 1.0614054
    %v111 = vmul.f32 %v109, 1.0614054
    %v112 = vadd.f32 %v110, -1.4531521
    %v113 = vadd.f32 %v111, -1.4531521
    %v114 = vmul.f32 %v112, %v108
    %v115 = vmul.f32 %v113, %v109
    %v116 = vadd.f32 %v114, 1.4214138
    %v117 = vadd.f32 %v115, 1.4214138
    %v118 = vmul.f32 %v116, %v108
    %v119 = vmul.f32 %v117, %v109
    %v120 = vadd.f32 %v118, -0.28449672
    %v121 = vadd.f32 %v119, -0.28449672
    %v122 = vmul.f32 %v120, %v108
    %v123 = vmul.f32 %v121, %v109
    %v124 = vadd.f32 %v122, 0.2548296
    %v125 = vadd.f32 %v123, 0.2548296
    %v126 = vmul.f32 %v124, %v108
    %v127 = vmul.f32 %v125, %v109
    %v128 = vsub.f32 0.0, %v102
    %v129 = vsub.f32 0.0, %v103
    %v130 = vmul.f32 %v128, %v102
    %v131 = vmul.f32 %v129, %v103
    %v132 = vmul.f32 %v130, 1.442695
    %v133 = vpow.pop %v132
    %v134 = vmul.f32 %v131, 1.442695
    %v135 = vpow.pop %v134
    %v136 = vmul.f32 %v126, %v133
    %v137 = vmul.f32 %v127, %v135
    %v138 = vsub.f32 1.0, %v136
    %v139 = vsub.f32 1.0, %v137
    %vm140 = vcmp.lt.f32.partialorder %v100, 0.0
    %vm141 = vcmp.lt.f32.partialorder %v101, 0.0
    %v142 = vsub.f32 0.0, %v138
    %v143 = vsub.f32 0.0, %v139
    %v144 = vsel %vm140, %v142, %v138
    %v145 = vsel %vm141, %v143, %v139
    %v146 = vadd.f32 %v144, 1.0
    %v147 = vadd.f32 %v145, 1.0
    %v148 = vmul.f32 %v98, %v146
    %v149 = vmul.f32 %v99, %v147
    %150 = vadd.xlane.f32.xlu0 %v148
    %v151 = vpop.xlane.xlu0 %150
    %152 = vadd.xlane.f32.xlu0 %v149
    %v153 = vpop.xlane.xlu0 %152
    %v154 = vrcp.pop 128.0
    %v155 = vmul.f32 128.0, %v154
    %v156 = vsub.f32 1.0, %v155
    %v157 = vmul.f32 %v154, %v156
    %v158 = vadd.f32 %v154, %v157
    %vm159 = vweird.f32 %v154
    %v160 = vsel %vm159, %v154, %v158
    %v161 = vmul.f32 %v151, %v160
    %v162 = vmul.f32 %v153, %v160
    %v163 = vsub.f32 %v148, %v161
    %v164 = vsub.f32 %v149, %v162
    %v165 = vmul.f32 %v163, %v163
    %v166 = vmul.f32 %v164, %v164
    %167 = vadd.xlane.f32.xlu0 %v165
    %v168 = vpop.xlane.xlu0 %167
    %169 = vadd.xlane.f32.xlu0 %v166
    %v170 = vpop.xlane.xlu0 %169
    %v171 = vmul.f32 %v168, %v160
    %v172 = vmul.f32 %v170, %v160
    %v173 = vadd.f32 %v171, 1e-12
    %v174 = vadd.f32 %v172, 1e-12
    %v175 = vrsqrt.pop %v173
    %v176 = vmul.f32 %v175, %v173
    %v177 = vmul.f32 %v176, %v175
    %v178 = vmul.f32 0.5, %v177
    %v179 = vsub.f32 1.5, %v178
    %v180 = vmul.f32 %v175, %v179
    %vm181 = vweird.f32 %v173
    %vm182 = vweird.f32 %v175
    %vm183 = vmor %vm181, %vm182
    %v184 = vsel %vm183, %v175, %v180
    %v185 = vrsqrt.pop %v174
    %v186 = vmul.f32 %v185, %v174
    %v187 = vmul.f32 %v186, %v185
    %v188 = vmul.f32 0.5, %v187
    %v189 = vsub.f32 1.5, %v188
    %v190 = vmul.f32 %v185, %v189
    %vm191 = vweird.f32 %v174
    %vm192 = vweird.f32 %v185
    %vm193 = vmor %vm191, %vm192
    %v194 = vsel %vm193, %v185, %v190
    %v195 = vmul.f32 %v163, %v184
    %v196 = vmul.f32 %v164, %v194
    %v197 = vld [vmem:[%s3] sm:$0x1]
    %v199 = vperm.slane %v197, 0
    %v201 = vmul.f32 %v199, %v195
    %v202 = vmul.f32 %v199, %v196
    %v203 = vld [vmem:[%s4] sm:$0x1]
    %v205 = vperm.slane %v203, 0
    %v207 = vadd.f32 %v201, %v205
    %v208 = vadd.f32 %v202, %v205
    %v209 = vpack.c.bf16 %v207, %v207
    %v210 = vpack.c.bf16 %v208, %v208
    %211 = vst [vmem:[#allocation7] sm:$0xf] %v209
    %212 = vst [vmem:[#allocation7 + $0x4] sm:$0xf] %v210
    // Predicated region
    $region30: #{tpu_custom_call.1} parent=1 // pred_check
      _
    $region31: #{tpu_custom_call.1} parent=1 // pred_check_branch
      %214 = sbr.rel (0) target = $region33
    $region32: #{tpu_custom_call.1} parent=1 // pred_region
      %216 = vsyncadd [#allocation4], 0
      %s217 = sshll.u32 [#allocation7], 4
      %s218 = int_to_ptr.vmem [resolvable:$true] %s217
      %s219 = sshll.u32 %s5, 4
      %s220 = int_to_ptr.hbm [resolvable:$true] %s219
      %225 = dma.vmem_to_hbm [thread:$0]  %s218, 128, %s220, [#allocation4], 64, 64, 4
    $region33: #{tpu_custom_call.1} parent=1 // pred_fallthru
      _
    // Predicated region
    $region34: #{tpu_custom_call.1} parent=1 // pred_check
      _
    $region35: #{tpu_custom_call.1} parent=1 // pred_check_branch
      %227 = sbr.rel (0) target = $region37
    $region36: #{tpu_custom_call.1} parent=1 // pred_region
      %229 = dma.done [#allocation4], 128
    $region37: #{tpu_custom_call.1} parent=1 // pred_fallthru
      _
    %230 = vsyncpa [#allocation3], 1
    %231 = vsyncpa [#allocation6], 1
    %232 = vsyncpa [#allocation4], 1

</llo_original>
